<compile_context>
chip_gen: v7x
topology: tpu7x:2x2x1
jax: 0.10.0
libtpu: 0.0.40
codegen_flags: <defaults>
</compile_context>

<pallas_src>
import jax
import jax.numpy as jnp
from jax.experimental import pallas as pl
from jax.experimental.pallas import tpu as pltpu

GLOBAL_STATE_LEN = 30   # in_features
HIDDEN = 64             # out_features

_VMEM_BUDGET_BYTES = 20 * 1024 * 1024   # double-buffered streamed blocks
_VMEM_LIMIT_BYTES = 32 * 1024 * 1024    # scoped VMEM limit (safe on all gens)
_MIN_GRID_STEPS = 4                     # aim for >=4 steps -> real pipelining
_MIN_BLOCK_ROWS = 512                   # ~85% of HBM roofline already here


def _linear_relu_kernel(x_ref, w_ref, b_ref, o_ref):
    # x_ref: (tb, 30)  w_ref: (30, 64) f32  b_ref: (1, 64) f32  o_ref: (tb, 64)
    # bf16/f16 x is upcast exactly inside the dot (== PyTorch x.float()).
    y = jnp.dot(x_ref[...], w_ref[...], preferred_element_type=jnp.float32)
    o_ref[...] = jnp.maximum(y + b_ref[...], 0.0).astype(o_ref.dtype)


def _choose_block_rows(batch, in_itemsize, out_itemsize):
    """Rows per grid step: VMEM-capped, >= _MIN_GRID_STEPS steps when possible."""
    # Double-buffered VMEM for the streamed blocks (lane dim pads to 128):
    #   2 * tb * 128 * (in_itemsize + out_itemsize) bytes
    per_row = 2 * 128 * (in_itemsize + out_itemsize)
    cap = max(16, (int(_VMEM_BUDGET_BYTES // per_row) // 16) * 16)  # f32: 10240
    target = max(_MIN_BLOCK_ROWS, pl.cdiv(batch, _MIN_GRID_STEPS))
    tb = max(16, (min(cap, target) // 16) * 16)
    if tb >= batch:
        return batch          # single step: full extent (any row count allowed)
    return tb                 # multiple of 16; ragged last block is masked


def global_state_layer(x, w, b, *, out_dtype=jnp.float32):
    """relu(x.float() @ w + b).

    x: (B, 30) any dtype; w: (30, 64) f32; b: (64,) f32 -> (B, 64) out_dtype.
    """
    assert x.ndim == 2 and x.shape[1] == GLOBAL_STATE_LEN
    batch = x.shape[0]

    # PyTorch's x.float(): only force a wrapper cast for non-float inputs so
    # bf16/f16 inputs keep the halved HBM read stream (upcast happens in-dot).
    if not jnp.issubdtype(x.dtype, jnp.floating):
        x = x.astype(jnp.float32)
    w = w.astype(jnp.float32)
    b2 = b.astype(jnp.float32).reshape(1, HIDDEN)   # tiny; negligible per call

    out_itemsize = jnp.dtype(out_dtype).itemsize
    tb = _choose_block_rows(batch, x.dtype.itemsize, out_itemsize)
    grid = (pl.cdiv(batch, tb),)

    cost = pl.CostEstimate(
        flops=2 * batch * GLOBAL_STATE_LEN * HIDDEN,
        transcendentals=0,
        bytes_accessed=(batch * GLOBAL_STATE_LEN * x.dtype.itemsize
                        + GLOBAL_STATE_LEN * HIDDEN * 4 + HIDDEN * 4
                        + batch * HIDDEN * out_itemsize),
    )

    return pl.pallas_call(
        _linear_relu_kernel,
        out_shape=jax.ShapeDtypeStruct((batch, HIDDEN), out_dtype),
        grid=grid,
        in_specs=[
            pl.BlockSpec((tb, GLOBAL_STATE_LEN), lambda i: (i, 0)),
            pl.BlockSpec((GLOBAL_STATE_LEN, HIDDEN), lambda i: (0, 0)),  # resident
            pl.BlockSpec((1, HIDDEN), lambda i: (0, 0)),                 # resident
        ],
        out_specs=pl.BlockSpec((tb, HIDDEN), lambda i: (i, 0)),
        compiler_params=pltpu.CompilerParams(
            dimension_semantics=("parallel",),
            vmem_limit_bytes=_VMEM_LIMIT_BYTES,
        ),
        cost_estimate=cost,
    )(x, w, b2)


def init_params(key):
    """Deterministic init mimicking nn.Linear default (uniform +/- 1/sqrt(fan_in))."""
    kw, kb = jax.random.split(key)
    bound = 1.0 / jnp.sqrt(jnp.float32(GLOBAL_STATE_LEN))
    # PyTorch stores weight as (out, in); we keep (in, out) for the kernel.
    w = jax.random.uniform(
        kw, (GLOBAL_STATE_LEN, HIDDEN), jnp.float32, minval=-bound, maxval=bound
    )
    b = jax.random.uniform(
        kb, (HIDDEN,), jnp.float32, minval=-bound, maxval=bound
    )
    return w, b


if __name__ == "__main__":
    key = jax.random.PRNGKey(0)
    kx, kp = jax.random.split(key)
    w, b = init_params(kp)

    # Small f32 case (single-step grid) + tiled cases incl. a ragged last block.
    for batch in (8, 1536, 1100):
        kx, sub = jax.random.split(kx)
        x = jax.random.normal(sub, (batch, GLOBAL_STATE_LEN), jnp.float32)
        out = jax.block_until_ready(global_state_layer(x, w, b))
        ref = jnp.maximum(x @ w + b, 0.0)
        assert out.shape == (batch, HIDDEN)
        assert out.dtype == jnp.float32
        assert jnp.allclose(out, ref, atol=1e-5, rtol=1e-5), f"mismatch at B={batch}"

    # bf16 input path (upcast happens inside the dot, == x.float()).
    kx, sub = jax.random.split(kx)
    xb = jax.random.normal(sub, (64, GLOBAL_STATE_LEN), jnp.float32).astype(jnp.bfloat16)
    outb = jax.block_until_ready(global_state_layer(xb, w, b))
    refb = jnp.maximum(xb.astype(jnp.float32) @ w + b, 0.0)
    assert jnp.allclose(outb, refb, atol=1e-3, rtol=1e-3)

    print("KERNEL_OK")
</pallas_src>

<mosaic_0001>
module attributes {stable_mosaic.version = 11 : i64} {
  func.func @_linear_relu_kernel(%arg0: i32, %arg1: memref<8x30xf32, #tpu.memory_space<vmem>>, %arg2: memref<30x64xf32, #tpu.memory_space<vmem>>, %arg3: memref<1x64xf32, #tpu.memory_space<vmem>>, %arg4: memref<8x64xf32, #tpu.memory_space<vmem>>) attributes {dimension_semantics = [#tpu.dimension_semantics<parallel>], iteration_bounds = array<i64: 1>, scalar_prefetch = 0 : i64, scratch_operands = 0 : i64, tpu.core_type = #tpu.core_type<tc>, window_params = [{transform_indices = @transform_0, window_bounds = array<i64: 8, 30>}, {pipeline_mode = #tpu.pipeline_mode<synchronous>, transform_indices = @transform_1, window_bounds = array<i64: 30, 64>}, {pipeline_mode = #tpu.pipeline_mode<synchronous>, transform_indices = @transform_2, window_bounds = array<i64: 1, 64>}, {transform_indices = @transform_3, window_bounds = array<i64: 8, 64>}]} {
    %c0 = arith.constant 0 : index
    %c0_0 = arith.constant 0 : index
    %0 = vector.load %arg1[%c0, %c0_0] : memref<8x30xf32, #tpu.memory_space<vmem>>, vector<8x30xf32>
    %c0_1 = arith.constant 0 : index
    %c0_2 = arith.constant 0 : index
    %1 = vector.load %arg2[%c0_1, %c0_2] : memref<30x64xf32, #tpu.memory_space<vmem>>, vector<30x64xf32>
    %cst = arith.constant dense<0.000000e+00> : vector<8x64xf32>
    %2 = tpu.matmul %0, %1, %cst {dimension_numbers = #tpu.dot_dimension_numbers<[1], [0], [0], [1], [0, 0, 1, 1], [], []>} : vector<8x30xf32>, vector<30x64xf32>, vector<8x64xf32> -> vector<8x64xf32>
    %c0_3 = arith.constant 0 : index
    %c0_4 = arith.constant 0 : index
    %3 = vector.load %arg3[%c0_3, %c0_4] : memref<1x64xf32, #tpu.memory_space<vmem>>, vector<1x64xf32>
    %4 = vector.broadcast %3 : vector<1x64xf32> to vector<8x64xf32>
    %5 = arith.addf %2, %4 : vector<8x64xf32>
    %cst_5 = arith.constant 0.000000e+00 : f32
    %6 = vector.broadcast %cst_5 : f32 to vector<8x64xf32>
    %7 = arith.maximumf %5, %6 : vector<8x64xf32>
    %c0_6 = arith.constant 0 : index
    %c0_7 = arith.constant 0 : index
    %8 = vector.load %arg4[%c0_6, %c0_7] : memref<8x64xf32, #tpu.memory_space<vmem>>, vector<8x64xf32>
    tpu.vector_store %arg4[%c0_6, %c0_7], %7 {strides = array<i32>} : memref<8x64xf32, #tpu.memory_space<vmem>>, vector<8x64xf32>,
    return
  }
  func.func @transform_0(%arg0: i32) -> (i32, i32) {
    %c0_i32 = arith.constant 0 : i32
    %c0_i32_0 = arith.constant 0 : i32
    return %arg0, %c0_i32 : i32, i32
  }
  func.func @transform_1(%arg0: i32) -> (i32, i32) {
    %c0_i32 = arith.constant 0 : i32
    %c0_i32_0 = arith.constant 0 : i32
    %c0_i32_1 = arith.constant 0 : i32
    return %c0_i32, %c0_i32_0 : i32, i32
  }
  func.func @transform_2(%arg0: i32) -> (i32, i32) {
    %c0_i32 = arith.constant 0 : i32
    %c0_i32_0 = arith.constant 0 : i32
    %c0_i32_1 = arith.constant 0 : i32
    return %c0_i32, %c0_i32_0 : i32, i32
  }
  func.func @transform_3(%arg0: i32) -> (i32, i32) {
    %c0_i32 = arith.constant 0 : i32
    %c0_i32_0 = arith.constant 0 : i32
    return %arg0, %c0_i32 : i32, i32
  }
}

</mosaic_0001>

<llo_original>
// kernel: tpu_custom_call.1
$region0: #{tpu_custom_call.1}
  #allocation0 [shape = 'u32[]', space=smem, size = 0x4, offset = 0x4, fixed_abs, tag = 'smem constant byte address 0x4 - core index']
  #allocation1 [shape = 'u32[144,128]{1,0:T(1,128)}', space=vmem, size = 0x12000, scoped, tag = 'internal scratch']
  %s0 = inlined_call_operand.hbm [shape: f32[8,30], index: 0, kind: input, shape index: {}]
  %s1 = inlined_call_operand.hbm [shape: f32[30,64], index: 1, kind: input, shape index: {}]
  %s2 = inlined_call_operand.vmem [shape: f32[1,64], index: 2, kind: input, shape index: {}]
  %s3 = inlined_call_operand.hbm [shape: f32[8,64], index: 3, kind: output, shape index: {}]
  %s4 = sld [smem:[#allocation0]]
  $region30: #{tpu_custom_call.1} parent=0
    _
  %s6 = ssub.s32 1, %s4
  %s7 = scalar_select 0, %s6, %s4
  $region1: #{tpu_custom_call.1} parent=0
    #allocation2 [shape = 'u8[4096]{0}', space=vmem, size = 0x1000, scoped, tag = 'input window, operand 0, single buffered']
    #allocation3 [shape = 's32[1]{0}', space=sflag, size = 0x4, scoped, tag = 'scoped memory for tpu_custom_call.1']
    #allocation4 [shape = 's32[1]{0}', space=sflag, size = 0x4, scoped, tag = 'scoped memory for tpu_custom_call.1']
    #allocation5 [shape = 'u8[16384]{0}', space=vmem, size = 0x4000, scoped, tag = 'input window, operand 1, single buffered']
    #allocation6 [shape = 's32[1]{0}', space=sflag, size = 0x4, scoped, tag = 'scoped memory for tpu_custom_call.1']
    #allocation7 [shape = 'u8[4096]{0}', space=vmem, size = 0x1000, scoped, tag = 'output window, operand 0, single buffered']
    %8 = vsyncpa [#allocation3], 0
    %9 = vsyncpa [#allocation6], 0
    %10 = vsyncpa [#allocation4], 0
    // Predicated region
    $region2: #{tpu_custom_call.1} parent=1 // pred_check
      _
    $region3: #{tpu_custom_call.1} parent=1 // pred_check_branch
      %12 = sbr.rel (0) target = $region5
    $region4: #{tpu_custom_call.1} parent=1 // pred_region
      %s14 = ssub.s32 128, 128
      %15 = vsyncadd [#allocation3], %s14
      %s17 = sshll.u32 [#allocation2], 4
      %s18 = int_to_ptr.vmem [resolvable:$true] %s17
      %20 = dma.hbm_to_vmem [thread:$0]  %s0, 128, %s18, [#allocation3]
    $region5: #{tpu_custom_call.1} parent=1 // pred_fallthru
      _
    // Predicated region
    $region6: #{tpu_custom_call.1} parent=1 // pred_check
      _
    $region7: #{tpu_custom_call.1} parent=1 // pred_check_branch
      %22 = sbr.rel (0) target = $region9
    $region8: #{tpu_custom_call.1} parent=1 // pred_region
      %s24 = ssub.s32 512, 512
      %25 = vsyncadd [#allocation6], %s24
      %s26 = sshll.u32 [#allocation5], 4
      %s27 = int_to_ptr.vmem [resolvable:$true] %s26
      %32 = dma.hbm_to_vmem [thread:$0]  %s1, 512, %s27, [#allocation6], 128, 128, 8
    $region9: #{tpu_custom_call.1} parent=1 // pred_fallthru
      _
    // Predicated region
    $region10: #{tpu_custom_call.1} parent=1 // pred_check
      _
    $region11: #{tpu_custom_call.1} parent=1 // pred_check_branch
      %34 = sbr.rel (0) target = $region13
    $region12: #{tpu_custom_call.1} parent=1 // pred_region
      _
    $region13: #{tpu_custom_call.1} parent=1 // pred_fallthru
      _
    // Predicated region
    $region14: #{tpu_custom_call.1} parent=1 // pred_check
      _
    $region15: #{tpu_custom_call.1} parent=1 // pred_check_branch
      %36 = sbr.rel (0) target = $region17
    $region16: #{tpu_custom_call.1} parent=1 // pred_region
      %37 = dma.done [#allocation3], 128
    $region17: #{tpu_custom_call.1} parent=1 // pred_fallthru
      _
    // Predicated region
    $region18: #{tpu_custom_call.1} parent=1 // pred_check
      _
    $region19: #{tpu_custom_call.1} parent=1 // pred_check_branch
      %39 = sbr.rel (0) target = $region21
    $region20: #{tpu_custom_call.1} parent=1 // pred_region
      %40 = dma.done [#allocation6], 512
    $region21: #{tpu_custom_call.1} parent=1 // pred_fallthru
      _
    %v41 = vld [vmem:[#allocation2] sm:$0xff]
    %v42 = vld [vmem:[#allocation5] sm:$0xff]
    %v43 = vld [vmem:[#allocation5 + $0x8] sm:$0xff]
    %v44 = vld [vmem:[#allocation5 + $0x10] sm:$0xff]
    %v45 = vld [vmem:[#allocation5 + $0x18] sm:$0x3f]
    %v46 = vld [vmem:[%s2] sm:$0x1]
    %v48 = vlaneseq
    %v49 = vshrl.u32 %v48, 7
    %v50 = vsub.s32 0, %v49
    %v51 = vrot.slane %v46, %v50
    %vm53 = vcmask 244736
    %v55 = vsel %vm53, %v41, 0
    %vm57 = vcmask 1045504
    %v59 = vsel %vm57, %v45, 0
    %61 = vmatprep.subr.mxu0 0.0
    %62 = vmatpush1.msra.mxu0 %v42
    %63 = vmatprep.subr.mxu0 0.0
    %64 = vmatpush1.msra.mxu0 %v43
    %65 = vmatprep.subr.mxu0 0.0
    %66 = vmatpush1.msra.mxu0 %v44
    %67 = vmatprep.subr.mxu0 0.0
    %68 = vmatpush1.msra.mxu0 %v59
    %69 = vmatprep.subr.mxu0 0.0
    %70 = vmatpush1.msra.mxu0 0.0
    %71 = vmatprep.subr.mxu0 0.0
    %72 = vmatpush1.msra.mxu0 0.0
    %73 = vmatprep.subr.mxu0 0.0
    %74 = vmatpush1.msra.mxu0 0.0
    %75 = vmatprep.subr.mxu0 0.0
    %76 = vmatpush1.msra.mxu0 0.0
    %77 = vmatprep.subr.mxu0 0.0
    %78 = vmatpush1.msra.mxu0 0.0
    %79 = vmatprep.subr.mxu0 0.0
    %80 = vmatpush1.msra.mxu0 0.0
    %81 = vmatprep.subr.mxu0 0.0
    %82 = vmatpush1.msra.mxu0 0.0
    %83 = vmatprep.subr.mxu0 0.0
    %84 = vmatpush1.msra.mxu0 0.0
    %85 = vmatprep.subr.mxu0 0.0
    %86 = vmatpush1.msra.mxu0 0.0
    %87 = vmatprep.subr.mxu0 0.0
    %88 = vmatpush1.msra.mxu0 0.0
    %89 = vmatprep.subr.mxu0 0.0
    %90 = vmatpush1.msra.mxu0 0.0
    %91 = vmatprep.subr.mxu0 0.0
    %92 = vmatpush1.msra.mxu0 0.0
    %93 = vmatprep.subr.mxu0 0.0
    %94 = vmatpush1.msra.mxu0 0.0
    %95 = vmatprep.subr.mxu0 0.0
    %96 = vmatpush1.msra.mxu0 0.0
    %97 = vmatprep.subr.mxu0 0.0
    %98 = vmatpush1.msra.mxu0 0.0
    %99 = vmatprep.subr.mxu0 0.0
    %100 = vmatpush1.msra.mxu0 0.0
    %101 = vmatprep.subr.mxu0 0.0
    %102 = vmatpush1.msra.mxu0 0.0
    %103 = vmatprep.subr.mxu0 0.0
    %104 = vmatpush1.msra.mxu0 0.0
    %105 = vmatprep.subr.mxu0 0.0
    %106 = vmatpush1.msra.mxu0 0.0
    %107 = vmatprep.subr.mxu0 0.0
    %108 = vmatpush1.msra.mxu0 0.0
    %109 = vmatprep.subr.mxu0 0.0
    %110 = vmatpush1.msra.mxu0 0.0
    %111 = vmatprep.subr.mxu0 0.0
    %112 = vmatpush1.msra.mxu0 0.0
    %113 = vmatprep.subr.mxu0 0.0
    %114 = vmatpush1.msra.mxu0 0.0
    %115 = vmatprep.subr.mxu0 0.0
    %116 = vmatpush1.msra.mxu0 0.0
    %117 = vmatprep.subr.mxu0 0.0
    %118 = vmatpush1.msra.mxu0 0.0
    %119 = vmatprep.subr.mxu0 0.0
    %120 = vmatpush1.msra.mxu0 0.0
    %121 = vmatprep.subr.mxu0 0.0
    %122 = vmatpush1.msra.mxu0 0.0
    %123 = vmatprep.subr.mxu0 0.0
    %124 = vmatpush1.msra.mxu0 0.0
    %125 = vmatprep.mubr.f32.mxu0 0.0
    %126 = vmatmul.mubr.f32.gmra.mrb[0].mxu0 %v55
    %v127 = vpop.f32.mrb[0].mxu0
    %v128 = vadd.f32 %v51, %v127
    %v129 = vpop.f32.mrb[0].mxu0
    %130 = vdwg.mxu0
    %v131 = vmax.f32 %v128, 0.0
    %vm132 = vcmask 523264
    %133 = vst.msk [vmem:[#allocation7] sm:$0xff] %vm132, %v131
    // Predicated region
    $region22: #{tpu_custom_call.1} parent=1 // pred_check
      _
    $region23: #{tpu_custom_call.1} parent=1 // pred_check_branch
      %135 = sbr.rel (0) target = $region25
    $region24: #{tpu_custom_call.1} parent=1 // pred_region
      %s137 = ssub.s32 128, 128
      %138 = vsyncadd [#allocation4], %s137
      %s140 = sshll.u32 [#allocation7], 4
      %s141 = int_to_ptr.vmem [resolvable:$true] %s140
      %143 = dma.vmem_to_hbm [thread:$0]  %s141, 128, %s3, [#allocation4]
    $region25: #{tpu_custom_call.1} parent=1 // pred_fallthru
      _
    // Predicated region
    $region26: #{tpu_custom_call.1} parent=1 // pred_check
      _
    $region27: #{tpu_custom_call.1} parent=1 // pred_check_branch
      %145 = sbr.rel (0) target = $region29
    $region28: #{tpu_custom_call.1} parent=1 // pred_region
      %146 = dma.done [#allocation4], 128
    $region29: #{tpu_custom_call.1} parent=1 // pred_fallthru
      _
    %147 = vsyncpa [#allocation3], 1
    %148 = vsyncpa [#allocation6], 1
    %149 = vsyncpa [#allocation4], 1

</llo_original>
